<compile_context>
chip_gen: v7x
topology: tpu7x:2x2x1
jax: 0.10.0
libtpu: 0.0.40
codegen_flags: <defaults>
</compile_context>

<pallas_src>
import jax
import jax.numpy as jnp
from jax.experimental import pallas as pl
from jax.experimental.pallas import tpu as pltpu


def _make_mrmse_kernel(n_rows, block_rows, ragged, need_cnt):
    def kernel(pred_ref, rating_ref, *out_refs):
        if need_cnt:
            sq_ref, cnt_ref, mask_ref = out_refs
        else:
            (sq_ref, mask_ref), cnt_ref = out_refs, None

        p = pred_ref[...].astype(jnp.float32)
        r = rating_ref[...].astype(jnp.float32)

        obs = r != 0.0                      # mask
        m = obs.astype(jnp.float32)         # mask.float()
        d = p * m - r                       # masked_pred - rating
        d2 = d * d

        # int8 mask writeback (1 B/elem).  For the ragged last block the rows
        # past the end of the array are dropped by Pallas' clipped
        # partial-block writeback (relied upon; tested in __main__).
        mask_ref[...] = obs.astype(jnp.int8)

        rows, cols = d2.shape

        def fold(x):
            # Sublane fold then lane-group fold: both layout-preserving, pure
            # vreg (VPU) adds; the stored partial stays lane-dense (8, 128).
            t = x.reshape(rows // 8, 8, cols).sum(axis=0)
            return t.reshape(8, cols // 128, 128).sum(axis=1)

        def store(sq_val, cnt_val):
            sq_ref[...] = fold(sq_val)
            if need_cnt:
                cnt_ref[...] = fold(cnt_val)

        if not ragged:
            store(d2, m)
        else:
            i = pl.program_id(0)
            is_last = i == pl.num_programs(0) - 1

            @pl.when(jnp.logical_not(is_last))
            def _():
                store(d2, m)

            @pl.when(is_last)
            def _():
                # Zero contributions from rows past the end of the array; also
                # guards against garbage/NaN in padded input reads (jnp.where
                # does not propagate the unselected branch).
                limit = n_rows - i * block_rows
                row = jax.lax.broadcasted_iota(jnp.int32, d2.shape, 0)
                valid = row < limit
                store(jnp.where(valid, d2, 0.0),
                      jnp.where(valid, m, 0.0) if need_cnt else None)

    return kernel


def mrmse_loss(pred, rating, reduction="sum", block_rows=None):
    """Returns (loss, mask) matching MRMSELoss.forward.

    `mask` is returned as an int8 0/1 array (1 == observed) straight from the
    kernel -- semantically `rating != 0`; torch returns bool.  No wrapper-side
    astype pass is performed (it would re-read/re-write the full N*M mask).
    """
    assert reduction in ("sum", "mean")
    assert pred.shape == rating.shape and pred.ndim == 2
    N, M = pred.shape
    need_cnt = reduction == "mean"

    def _prep(x):
        # bf16/f32 go straight to the kernel (upcast in-kernel); others -> f32.
        if x.dtype in (jnp.bfloat16, jnp.float32):
            return x
        return x.astype(jnp.float32)

    pred = _prep(pred)
    rating = _prep(rating)

    # Pad the item axis to a multiple of 128 so all stores stay lane-dense.
    # Zero-padded ratings give mask=0 and d2=0 -> loss unchanged.
    M_pad = ((M + 127) // 128) * 128
    if M_pad != M:
        pred = jnp.pad(pred, ((0, 0), (0, M_pad - M)))
        rating = jnp.pad(rating, ((0, 0), (0, M_pad - M)))

    in_bytes = pred.dtype.itemsize + rating.dtype.itemsize
    n_part = 2 if need_cnt else 1

    # VMEM capacity with headroom (v7x has only 64 MiB/TC -> never request it all).
    try:
        vmem_cap = int(pltpu.get_tpu_info().vmem_capacity_bytes)
    except Exception:
        vmem_cap = 64 << 20  # conservative (v7x) fallback
    vmem_budget = (vmem_cap * 3) // 4

    n_pad32 = ((N + 31) // 32) * 32
    auto = block_rows is None
    if auto:
        # Per-input tile target: ~8 MiB on 128 MiB-VMEM chips (v5e/v6e),
        # ~4 MiB on v7x; both sit on the HBM roofline while amortizing the
        # ~0.35 us/step overhead.  Sized from the actual input itemsize.
        tile_target = (8 << 20) if vmem_cap >= (128 << 20) else (4 << 20)
        per_row = M_pad * max(pred.dtype.itemsize, rating.dtype.itemsize)
        block_rows = max(32, (tile_target // per_row) // 32 * 32)
    else:
        # Multiple of 32 matches bf16 (16,128) and int8 (32,128) sublane packing.
        block_rows = max(32, (block_rows // 32) * 32)
    block_rows = min(block_rows, n_pad32)

    def _nblocks(b):
        return -(-N // b)

    if auto and _nblocks(block_rows) < 4 and N > 32:
        # Megacore (v7x): keep >= 2 grid steps (prefer 4) on the "parallel"
        # axis so both TensorCores get work; don't shrink a per-input tile
        # below ~1 MiB just to reach 4 steps.  ~zero delta on 1-TC v5e/v6e.
        cand4 = max(32, ((N + 3) // 4) // 32 * 32)
        cand2 = max(32, ((N + 1) // 2) // 32 * 32)
        if _nblocks(cand4) >= 4 and cand4 * M_pad * pred.dtype.itemsize >= (1 << 20):
            block_rows = min(block_rows, cand4)
        elif _nblocks(cand2) >= 2:
            block_rows = min(block_rows, cand2)

    def _tile_bytes(br):
        # one pipeline stage: both input tiles + int8 mask tile + partial slabs
        return br * M_pad * (in_bytes + 1) + n_part * 8 * 128 * 4

    # Shrink if the double-buffered footprint would exceed the VMEM budget.
    while block_rows > 32 and 2 * _tile_bytes(block_rows) + (4 << 20) > vmem_budget:
        block_rows = max(32, ((block_rows // 2) // 32) * 32)

    num_blocks = _nblocks(block_rows)
    ragged = (N % block_rows) != 0

    needed = 2 * _tile_bytes(block_rows) + (4 << 20)
    vmem_limit = int(min(max(needed, 32 << 20), vmem_budget))
    vmem_limit = max(vmem_limit, needed)

    kernel = _make_mrmse_kernel(N, block_rows, ragged, need_cnt)

    out_shape = [jax.ShapeDtypeStruct((num_blocks * 8, 128), jnp.float32)]
    out_specs = [pl.BlockSpec((8, 128), lambda i: (i, 0))]
    if need_cnt:
        out_shape.append(jax.ShapeDtypeStruct((num_blocks * 8, 128), jnp.float32))
        out_specs.append(pl.BlockSpec((8, 128), lambda i: (i, 0)))
    out_shape.append(jax.ShapeDtypeStruct((N, M_pad), jnp.int8))
    out_specs.append(pl.BlockSpec((block_rows, M_pad), lambda i: (i, 0)))

    outs = pl.pallas_call(
        kernel,
        out_shape=tuple(out_shape),
        grid=(num_blocks,),
        in_specs=[
            pl.BlockSpec((block_rows, M_pad), lambda i: (i, 0)),
            pl.BlockSpec((block_rows, M_pad), lambda i: (i, 0)),
        ],
        out_specs=tuple(out_specs),
        compiler_params=pltpu.CompilerParams(
            dimension_semantics=("parallel",),
            vmem_limit_bytes=vmem_limit,
        ),
    )(pred, rating)

    if need_cnt:
        sq_part, cnt_part, mask = outs
    else:
        sq_part, mask = outs
        cnt_part = None

    if M_pad != M:
        # Only triggered for non-multiple-of-128 item counts.
        mask = mask[:, :M]

    sq_sum = jnp.sum(sq_part)
    if reduction == "sum":
        # torch: loss_sum / torch.Tensor([1.0]) -> shape (1,)
        loss = jnp.reshape(sq_sum, (1,))
    else:  # 'mean'
        num_observed = jnp.sum(cnt_part)
        # torch: MSELoss('mean') divides by numel = N*M, then by sum(mask).
        # Divide by N and M separately so each divisor is exactly
        # f32-representable even when N*M > 2^24 (differs <= 1 ulp).
        loss = ((sq_sum / N) / M) / num_observed
    return loss, mask


if __name__ == "__main__":
    key = jax.random.PRNGKey(0)
    k1, k2, k3 = jax.random.split(key, 3)

    # Small (users, items) rating matrix; N chosen so the last row-block is ragged.
    N, M = 608, 128
    block_rows = 256  # -> grid of 3 blocks, last block has 96 valid rows

    pred = jax.random.normal(k1, (N, M), dtype=jnp.float32)
    # sparse ratings in {0} U [1,5]; ~50% observed
    raw = jax.random.randint(k2, (N, M), 1, 6).astype(jnp.float32)
    observed = jax.random.uniform(k3, (N, M)) < 0.5
    rating = jnp.where(observed, raw, 0.0)

    loss, mask = mrmse_loss(pred, rating, reduction="sum", block_rows=block_rows)
    loss = jax.block_until_ready(loss)
    mask = jax.block_until_ready(mask)

    # Plain-JAX reference.
    ref_mask = rating != 0
    ref_sum = jnp.sum((pred * ref_mask.astype(jnp.float32) - rating) ** 2)
    assert loss.shape == (1,)
    assert jnp.allclose(loss[0], ref_sum, rtol=1e-4)
    assert mask.shape == (N, M)
    assert bool(jnp.all(mask == ref_mask))          # int8 0/1 vs bool -> promotes

    # 'mean' path (mean-MSE divided by observed count, as in the torch module).
    loss_mean, mask_m = mrmse_loss(pred, rating, reduction="mean",
                                   block_rows=block_rows)
    loss_mean = jax.block_until_ready(loss_mean)
    ref_mean = (ref_sum / (N * M)) / jnp.sum(ref_mask)
    assert jnp.allclose(loss_mean, ref_mean, rtol=1e-4)
    assert bool(jnp.all(mask_m == ref_mask))

    # Also exercise the default (auto) block_rows path once.
    loss_d, mask_d = mrmse_loss(pred, rating, reduction="sum")
    assert jnp.allclose(jax.block_until_ready(loss_d)[0], ref_sum, rtol=1e-4)
    assert bool(jnp.all(mask_d == ref_mask))

    print("KERNEL_OK")
</pallas_src>

<mosaic_0001>
module attributes {stable_mosaic.version = 11 : i64} {
  func.func @kernel(%arg0: i32, %arg1: memref<256x128xf32, #tpu.memory_space<vmem>>, %arg2: memref<256x128xf32, #tpu.memory_space<vmem>>, %arg3: memref<8x128xf32, #tpu.memory_space<vmem>>, %arg4: memref<256x128xi8, #tpu.memory_space<vmem>>) attributes {dimension_semantics = [#tpu.dimension_semantics<parallel>], iteration_bounds = array<i64: 3>, scalar_prefetch = 0 : i64, scratch_operands = 0 : i64, tpu.core_type = #tpu.core_type<tc>, window_params = [{transform_indices = @transform_0, window_bounds = array<i64: 256, 128>}, {transform_indices = @transform_1, window_bounds = array<i64: 256, 128>}, {transform_indices = @transform_2, window_bounds = array<i64: 8, 128>}, {transform_indices = @transform_3, window_bounds = array<i64: 256, 128>}]} {
    %c0 = arith.constant 0 : index
    %c0_0 = arith.constant 0 : index
    %0 = vector.load %arg1[%c0, %c0_0] : memref<256x128xf32, #tpu.memory_space<vmem>>, vector<256x128xf32>
    %c0_1 = arith.constant 0 : index
    %c0_2 = arith.constant 0 : index
    %1 = vector.load %arg2[%c0_1, %c0_2] : memref<256x128xf32, #tpu.memory_space<vmem>>, vector<256x128xf32>
    %cst = arith.constant 0.000000e+00 : f32
    %2 = vector.broadcast %cst : f32 to vector<256x128xf32>
    %3 = arith.cmpf one, %1, %2 : vector<256x128xf32>
    %4 = arith.extui %3 : vector<256x128xi1> to vector<256x128xi32>
    %5 = arith.sitofp %4 : vector<256x128xi32> to vector<256x128xf32>
    %6 = arith.mulf %0, %5 : vector<256x128xf32>
    %7 = arith.subf %6, %1 : vector<256x128xf32>
    %8 = arith.mulf %7, %7 : vector<256x128xf32>
    %9 = arith.extui %3 : vector<256x128xi1> to vector<256x128xi8>
    %c0_3 = arith.constant 0 : index
    %c0_4 = arith.constant 0 : index
    %10 = vector.load %arg4[%c0_3, %c0_4] : memref<256x128xi8, #tpu.memory_space<vmem>>, vector<256x128xi8>
    tpu.vector_store %arg4[%c0_3, %c0_4], %9 {strides = array<i32>} : memref<256x128xi8, #tpu.memory_space<vmem>>, vector<256x128xi8>,
    %c2_i32 = arith.constant 2 : i32
    %11 = arith.cmpi eq, %arg0, %c2_i32 : i32
    %true = arith.constant true
    %12 = arith.xori %11, %true : i1
    %13 = arith.extui %12 : i1 to i32
    %c0_i32 = arith.constant 0 : i32
    %14 = arith.cmpi ne, %13, %c0_i32 : i32
    scf.if %14 {
      %17 = vector.shape_cast %8 : vector<256x128xf32> to vector<32x8x128xf32>
      %cst_6 = arith.constant dense<0.000000e+00> : vector<8x128xf32>
      %18 = vector.multi_reduction <add>, %17, %cst_6 [0] : vector<32x8x128xf32> to vector<8x128xf32>
      %19 = vector.shape_cast %18 : vector<8x128xf32> to vector<8x1x128xf32>
      %cst_7 = arith.constant dense<0.000000e+00> : vector<8x128xf32>
      %20 = vector.multi_reduction <add>, %19, %cst_7 [1] : vector<8x1x128xf32> to vector<8x128xf32>
      %c0_8 = arith.constant 0 : index
      %c0_9 = arith.constant 0 : index
      %21 = vector.load %arg3[%c0_8, %c0_9] : memref<8x128xf32, #tpu.memory_space<vmem>>, vector<8x128xf32>
      tpu.vector_store %arg3[%c0_8, %c0_9], %20 {strides = array<i32>} : memref<8x128xf32, #tpu.memory_space<vmem>>, vector<8x128xf32>,
    } else {
    }
    %15 = arith.extui %11 : i1 to i32
    %c0_i32_5 = arith.constant 0 : i32
    %16 = arith.cmpi ne, %15, %c0_i32_5 : i32
    scf.if %16 {
      %c256_i32 = arith.constant 256 : i32
      %17 = arith.muli %arg0, %c256_i32 : i32
      %c608_i32 = arith.constant 608 : i32
      %18 = arith.subi %c608_i32, %17 : i32
      %19 = tpu.iota {dimensions = array<i32: 0>} : vector<256x128xi32>
      %20 = vector.broadcast %18 : i32 to vector<256x128xi32>
      %21 = arith.cmpi slt, %19, %20 : vector<256x128xi32>
      %cst_6 = arith.constant 0.000000e+00 : f32
      %22 = vector.broadcast %cst_6 : f32 to vector<256x128xf32>
      %23 = arith.select %21, %8, %22 : vector<256x128xi1>, vector<256x128xf32>
      %24 = vector.shape_cast %23 : vector<256x128xf32> to vector<32x8x128xf32>
      %cst_7 = arith.constant dense<0.000000e+00> : vector<8x128xf32>
      %25 = vector.multi_reduction <add>, %24, %cst_7 [0] : vector<32x8x128xf32> to vector<8x128xf32>
      %26 = vector.shape_cast %25 : vector<8x128xf32> to vector<8x1x128xf32>
      %cst_8 = arith.constant dense<0.000000e+00> : vector<8x128xf32>
      %27 = vector.multi_reduction <add>, %26, %cst_8 [1] : vector<8x1x128xf32> to vector<8x128xf32>
      %c0_9 = arith.constant 0 : index
      %c0_10 = arith.constant 0 : index
      %28 = vector.load %arg3[%c0_9, %c0_10] : memref<8x128xf32, #tpu.memory_space<vmem>>, vector<8x128xf32>
      tpu.vector_store %arg3[%c0_9, %c0_10], %27 {strides = array<i32>} : memref<8x128xf32, #tpu.memory_space<vmem>>, vector<8x128xf32>,
    } else {
    }
    return
  }
  func.func @transform_0(%arg0: i32) -> (i32, i32) {
    %c0_i32 = arith.constant 0 : i32
    %c0_i32_0 = arith.constant 0 : i32
    return %arg0, %c0_i32 : i32, i32
  }
  func.func @transform_1(%arg0: i32) -> (i32, i32) {
    %c0_i32 = arith.constant 0 : i32
    %c0_i32_0 = arith.constant 0 : i32
    return %arg0, %c0_i32 : i32, i32
  }
  func.func @transform_2(%arg0: i32) -> (i32, i32) {
    %c0_i32 = arith.constant 0 : i32
    %c0_i32_0 = arith.constant 0 : i32
    return %arg0, %c0_i32 : i32, i32
  }
  func.func @transform_3(%arg0: i32) -> (i32, i32) {
    %c0_i32 = arith.constant 0 : i32
    %c0_i32_0 = arith.constant 0 : i32
    return %arg0, %c0_i32 : i32, i32
  }
}

</mosaic_0001>

<llo_original>
// kernel: tpu_custom_call.1
$region0: #{tpu_custom_call.1}
  #allocation0 [shape = 'u32[]', space=smem, size = 0x4, offset = 0x4, fixed_abs, tag = 'smem constant byte address 0x4 - core index']
  #allocation1 [shape = 'u32[144,128]{1,0:T(1,128)}', space=vmem, size = 0x12000, scoped, tag = 'internal scratch']
  %s0 = inlined_call_operand.hbm [shape: f32[608,128], index: 0, kind: input, shape index: {}]
  %s1 = inlined_call_operand.hbm [shape: f32[608,128], index: 1, kind: input, shape index: {}]
  %s2 = inlined_call_operand.hbm [shape: f32[24,128], index: 2, kind: output, shape index: {0}]
  %s3 = inlined_call_operand.hbm [shape: s8[608,128], index: 3, kind: output, shape index: {1}]
  %4 = xla_tuple %s2, %s3
  %s5 = sld [smem:[#allocation0]]
  $region65: #{tpu_custom_call.1} parent=0
    _
  %s7 = ssub.s32 1, %s5
  %s8 = scalar_select 0, %s7, %s5
  $region1: #{tpu_custom_call.1} parent=0
    #allocation2 [shape = 'u8[262144]{0}', space=vmem, size = 0x40000, scoped, tag = 'input window, operand 0']
    #allocation3 [shape = 's32[2]{0}', space=sflag, size = 0x8, scoped, tag = 'scoped memory for tpu_custom_call.1']
    #allocation4 [shape = 's32[2]{0}', space=sflag, size = 0x8, scoped, tag = 'scoped memory for tpu_custom_call.1']
    #allocation5 [shape = 'u8[262144]{0}', space=vmem, size = 0x40000, scoped, tag = 'input window, operand 1']
    #allocation6 [shape = 's32[2]{0}', space=sflag, size = 0x8, scoped, tag = 'scoped memory for tpu_custom_call.1']
    #allocation7 [shape = 'u8[8192]{0}', space=vmem, size = 0x2000, scoped, tag = 'output window, operand 0']
    #allocation8 [shape = 'u8[65536]{0}', space=vmem, size = 0x10000, scoped, tag = 'output window, operand 1']
    #allocation9 [shape = 's32[2]{0}', space=sflag, size = 0x8, scoped, tag = 'scoped memory for tpu_custom_call.1']
    %9 = vsyncpa [#allocation3], 0
    %s10 = scalar_lea.sflag [#allocation3], 1
    %11 = vsyncpa %s10, 0
    %12 = vsyncpa [#allocation6], 0
    %s13 = scalar_lea.sflag [#allocation6], 1
    %14 = vsyncpa %s13, 0
    %15 = vsyncpa [#allocation4], 0
    %s16 = scalar_lea.sflag [#allocation4], 1
    %17 = vsyncpa %s16, 0
    %18 = vsyncpa [#allocation9], 0
    %s19 = scalar_lea.sflag [#allocation9], 1
    %20 = vsyncpa %s19, 0
    loop: start=0, step=1, limit=5
    $region2: #{tpu_custom_call.1} parent=1 // loop_pre_header
      _
    $region3: #{tpu_custom_call.1} parent=1 // loop_header
      %s22 = sphi 0, %s26
      %p23 = scmp.ge.s32.totalorder %s22, 5
      %s32 = sphi 0, %s34
      %s35 = sphi 0, %s32
      %s36 = sphi 0, %s35
      %s52 = sphi 0, %s36
      %s58 = sphi 0, %s60
      %s61 = sphi 0, %s58
      %s62 = sphi 0, %s61
      %s78 = sphi 0, %s62
      %s84 = sphi 0, %s86
      %s87 = sphi 0, %s84
      %s88 = sphi 0, %s87
      %s104 = sphi 0, %s88
      %s110 = sphi 0, %s112
      %s113 = sphi 0, %s110
      %s114 = sphi 0, %s113
      %s130 = sphi 0, %s114
    $region4: #{tpu_custom_call.1} parent=1 // loop_header_branch
      %25 = sbr.rel (%p23) target = $region8
    $region5: #{tpu_custom_call.1} parent=1 // loop_body
      %s27 = ssub.s32 %s22, 1
      %s28 = ssub.s32 %s22, 2
      %s29 = sadd.s32 %s22, 1
      %s30 = ssub.s32 %s22, %s29
      %p31 = scmp.eq.s32.totalorder %s30, 0
      %s33 = sadd.s32 %s32, 1
      %s34 = scalar_select %p31, %s32, %s33
      %p37 = pneg %p31
      %p38 = scmp.eq.s32.totalorder %s22, 2
      %p39 = por %p37, %p38
      %p40 = scmp.ne.s32.totalorder %s32, %s35
      %p41 = scmp.eq.s32.totalorder %s22, 0
      %p42 = por %p40, %p41
      %p43 = scmp.ne.s32.totalorder %s32, %s35
      %p44 = scmp.eq.s32.totalorder %s27, 2
      %p45 = por %p43, %p44
      %p46 = scmp.ne.s32.totalorder %s35, %s36
      %p47 = scmp.eq.s32.totalorder %s27, 0
      %p48 = por %p46, %p47
      %p49 = scmp.ne.s32.totalorder %s35, %s36
      %p50 = scmp.eq.s32.totalorder %s28, 2
      %p51 = por %p49, %p50
      %p53 = scmp.ne.s32.totalorder %s36, %s52
      %p54 = scmp.eq.s32.totalorder %s28, 0
      %p55 = por %p53, %p54
      %s56 = ssub.s32 %s22, %s29
      %p57 = scmp.eq.s32.totalorder %s56, 0
      %s59 = sadd.s32 %s58, 1
      %s60 = scalar_select %p57, %s58, %s59
      %p63 = pneg %p57
      %p64 = scmp.eq.s32.totalorder %s22, 2
      %p65 = por %p63, %p64
      %p66 = scmp.ne.s32.totalorder %s58, %s61
      %p67 = scmp.eq.s32.totalorder %s22, 0
      %p68 = por %p66, %p67
      %p69 = scmp.ne.s32.totalorder %s58, %s61
      %p70 = scmp.eq.s32.totalorder %s27, 2
      %p71 = por %p69, %p70
      %p72 = scmp.ne.s32.totalorder %s61, %s62
      %p73 = scmp.eq.s32.totalorder %s27, 0
      %p74 = por %p72, %p73
      %p75 = scmp.ne.s32.totalorder %s61, %s62
      %p76 = scmp.eq.s32.totalorder %s28, 2
      %p77 = por %p75, %p76
      %p79 = scmp.ne.s32.totalorder %s62, %s78
      %p80 = scmp.eq.s32.totalorder %s28, 0
      %p81 = por %p79, %p80
      %s82 = ssub.s32 %s22, %s29
      %p83 = scmp.eq.s32.totalorder %s82, 0
      %s85 = sadd.s32 %s84, 1
      %s86 = scalar_select %p83, %s84, %s85
      %p89 = pneg %p83
      %p90 = scmp.eq.s32.totalorder %s22, 2
      %p91 = por %p89, %p90
      %p92 = scmp.ne.s32.totalorder %s84, %s87
      %p93 = scmp.eq.s32.totalorder %s22, 0
      %p94 = por %p92, %p93
      %p95 = scmp.ne.s32.totalorder %s84, %s87
      %p96 = scmp.eq.s32.totalorder %s27, 2
      %p97 = por %p95, %p96
      %p98 = scmp.ne.s32.totalorder %s87, %s88
      %p99 = scmp.eq.s32.totalorder %s27, 0
      %p100 = por %p98, %p99
      %p101 = scmp.ne.s32.totalorder %s87, %s88
      %p102 = scmp.eq.s32.totalorder %s28, 2
      %p103 = por %p101, %p102
      %p105 = scmp.ne.s32.totalorder %s88, %s104
      %p106 = scmp.eq.s32.totalorder %s28, 0
      %p107 = por %p105, %p106
      %s108 = ssub.s32 %s22, %s29
      %p109 = scmp.eq.s32.totalorder %s108, 0
      %s111 = sadd.s32 %s110, 1
      %s112 = scalar_select %p109, %s110, %s111
      %p115 = pneg %p109
      %p116 = scmp.eq.s32.totalorder %s22, 2
      %p117 = por %p115, %p116
      %p118 = scmp.ne.s32.totalorder %s110, %s113
      %p119 = scmp.eq.s32.totalorder %s22, 0
      %p120 = por %p118, %p119
      %p121 = scmp.ne.s32.totalorder %s110, %s113
      %p122 = scmp.eq.s32.totalorder %s27, 2
      %p123 = por %p121, %p122
      %p124 = scmp.ne.s32.totalorder %s113, %s114
      %p125 = scmp.eq.s32.totalorder %s27, 0
      %p126 = por %p124, %p125
      %p127 = scmp.ne.s32.totalorder %s113, %s114
      %p128 = scmp.eq.s32.totalorder %s28, 2
      %p129 = por %p127, %p128
      %p131 = scmp.ne.s32.totalorder %s114, %s130
      %p132 = scmp.eq.s32.totalorder %s28, 0
      %p133 = por %p131, %p132
      %p134 = scmp.le.s32.totalorder 1, %s22
      %p135 = scmp.lt.s32.totalorder %s22, 4
      %p136 = pnand %p134, %p135
      %p137 = pneg %p136
      // Predicated region
      $region9: #{tpu_custom_call.1} parent=5 // pred_check
        _
      $region10: #{tpu_custom_call.1} parent=5 // pred_check_branch
        %139 = sbr.rel (%p136) target = $region12
      $region11: #{tpu_custom_call.1} parent=5 // pred_region
        %s140 = ssub.s32 %s22, 1
      $region12: #{tpu_custom_call.1} parent=5 // pred_fallthru
        _
      %p141 = scmp.lt.s32.totalorder %s22, 3
      // Predicated region
      $region13: #{tpu_custom_call.1} parent=5 // pred_check
        %p142 = pneg %p141
      $region14: #{tpu_custom_call.1} parent=5 // pred_check_branch
        %144 = sbr.rel (%p142) target = $region16
      $region15: #{tpu_custom_call.1} parent=5 // pred_region
        // Predicated region
        $region17: #{tpu_custom_call.1} parent=15 // pred_check
          %p145 = pneg %p42
        $region18: #{tpu_custom_call.1} parent=15 // pred_check_branch
          %147 = sbr.rel (%p145) target = $region20
        $region19: #{tpu_custom_call.1} parent=15 // pred_region
          %s148 = sand.u32 %s32, 1
          %s149 = scalar_lea.sflag [#allocation3], %s148
          %s150 = sand.u32 %s32, 1
          %s151 = smul.addr %s150, 256
          %s152 = scalar_lea.vmem [#allocation2], %s151
          %s153 = smul.u32 32, %s22
          %s154 = ssub.s32 76, %s153
          %p155 = scmp.lt.s32.totalorder %s154, 32
          %s156 = scalar_select %p155, %s154, 32
          %s157 = smul.u32 128, %s156
          %s159 = ssub.s32 4096, %s157
          %160 = vsyncadd %s149, %s159
          %p161 = scmp.ne.s32.totalorder 0, %s157
          %s162 = smul.addr %s153, 128
          %s163 = scalar_lea.hbm %s0, %s162
          %s164 = smul.u32 8, %s156
          %s165 = sshll.u32 %s152, 4
          %s166 = int_to_ptr.vmem [resolvable:$true] %s165
          %s167 = sshll.u32 %s164, 4
          %171 = dma.hbm_to_vmem [thread:$0]  (%p161), %s163, %s167, %s166, %s149, 128, 128, 8
        $region20: #{tpu_custom_call.1} parent=15 // pred_fallthru
          _
        // Predicated region
        $region21: #{tpu_custom_call.1} parent=15 // pred_check
          %p172 = pneg %p68
        $region22: #{tpu_custom_call.1} parent=15 // pred_check_branch
          %174 = sbr.rel (%p172) target = $region24
        $region23: #{tpu_custom_call.1} parent=15 // pred_region
          %s175 = sand.u32 %s58, 1
          %s176 = scalar_lea.sflag [#allocation6], %s175
          %s177 = sand.u32 %s58, 1
          %s178 = smul.addr %s177, 256
          %s179 = scalar_lea.vmem [#allocation5], %s178
          %s180 = smul.u32 32, %s22
          %s181 = ssub.s32 76, %s180
          %p182 = scmp.lt.s32.totalorder %s181, 32
          %s183 = scalar_select %p182, %s181, 32
          %s184 = smul.u32 128, %s183
          %s186 = ssub.s32 4096, %s184
          %187 = vsyncadd %s176, %s186
          %p188 = scmp.ne.s32.totalorder 0, %s184
          %s189 = smul.addr %s180, 128
          %s190 = scalar_lea.hbm %s1, %s189
          %s191 = smul.u32 8, %s183
          %s192 = sshll.u32 %s179, 4
          %s193 = int_to_ptr.vmem [resolvable:$true] %s192
          %s194 = sshll.u32 %s191, 4
          %198 = dma.hbm_to_vmem [thread:$0]  (%p188), %s190, %s194, %s193, %s176, 128, 128, 8
        $region24: #{tpu_custom_call.1} parent=15 // pred_fallthru
          _
      $region16: #{tpu_custom_call.1} parent=5 // pred_fallthru
        _
      %p199 = scmp.le.s32.totalorder 1, %s22
      %p200 = scmp.lt.s32.totalorder %s22, 4
      %p201 = pnand %p199, %p200
      %p202 = pneg %p201
      // Predicated region
      $region25: #{tpu_custom_call.1} parent=5 // pred_check
        _
      $region26: #{tpu_custom_call.1} parent=5 // pred_check_branch
        %204 = sbr.rel (%p201) target = $region28
      $region27: #{tpu_custom_call.1} parent=5 // pred_region
        %s205 = ssub.s32 %s22, 1
        %s206 = sand.u32 %s35, 1
        %s207 = scalar_lea.sflag [#allocation3], %s206
        %s208 = sand.u32 %s35, 1
        %s209 = smul.addr %s208, 256
        %s210 = scalar_lea.vmem [#allocation2], %s209
        // Predicated region
        $region29: #{tpu_custom_call.1} parent=27 // pred_check
          %p211 = pneg %p48
        $region30: #{tpu_custom_call.1} parent=27 // pred_check_branch
          %213 = sbr.rel (%p211) target = $region32
        $region31: #{tpu_custom_call.1} parent=27 // pred_region
          %214 = dma.done %s207, 4096
        $region32: #{tpu_custom_call.1} parent=27 // pred_fallthru
          _
        %s215 = sand.u32 %s61, 1
        %s216 = scalar_lea.sflag [#allocation6], %s215
        %s217 = sand.u32 %s61, 1
        %s218 = smul.addr %s217, 256
        %s219 = scalar_lea.vmem [#allocation5], %s218
        // Predicated region
        $region33: #{tpu_custom_call.1} parent=27 // pred_check
          %p220 = pneg %p74
        $region34: #{tpu_custom_call.1} parent=27 // pred_check_branch
          %222 = sbr.rel (%p220) target = $region36
        $region35: #{tpu_custom_call.1} parent=27 // pred_region
          %223 = dma.done %s216, 4096
        $region36: #{tpu_custom_call.1} parent=27 // pred_fallthru
          _
        %s224 = sand.u32 %s35, 1
        %s225 = scalar_lea.sflag [#allocation3], %s224
        %s226 = sand.u32 %s35, 1
        %s227 = smul.addr %s226, 256
        %s228 = scalar_lea.vmem [#allocation2], %s227
        %p229 = pneg %p48
        %p230 = pneg %p45
        %s231 = sand.u32 %s61, 1
        %s232 = scalar_lea.sflag [#allocation6], %s231
        %s233 = sand.u32 %s61, 1
        %s234 = smul.addr %s233, 256
        %s235 = scalar_lea.vmem [#allocation5], %s234
        %p236 = pneg %p74
        %p237 = pneg %p71
        %p238 = pneg %p100
        %p239 = pneg %p97
        %s240 = sand.u32 %s87, 1
        %s241 = scalar_lea.sflag [#allocation4], %s240
        %s242 = sand.u32 %s87, 1
        %s243 = smul.addr %s242, 8
        %s244 = scalar_lea.vmem [#allocation7], %s243
        %p245 = pneg %p126
        %p246 = pneg %p123
        %s247 = sand.u32 %s113, 1
        %s248 = scalar_lea.sflag [#allocation9], %s247
        %s249 = sand.u32 %s113, 1
        %s250 = smul.addr %s249, 64
        %s251 = scalar_lea.vmem [#allocation8], %s250
        %s252 = smul.u32 32, %s27
        %s253 = ssub.s32 76, %s252
        %p254 = scmp.lt.s32.totalorder %s253, 32
        %s255 = scalar_select %p254, %s253, 32
        %s256 = smul.u32 128, %s255
        %s257 = smul.u32 32, %s27
        %s258 = ssub.s32 76, %s257
        %p259 = scmp.lt.s32.totalorder %s258, 32
        %s260 = scalar_select %p259, %s258, 32
        %s261 = smul.u32 128, %s260
        %s262 = smul.u32 8, %s27
        %s263 = ssub.s32 19, %s262
        %p264 = scmp.lt.s32.totalorder %s263, 8
        %s265 = scalar_select %p264, %s263, 8
        %s266 = smul.u32 128, %s265
        %v269 = vld [vmem:[%s210] sm:$0xff]
        %v270 = vld [vmem:[%s210 + $0x8] sm:$0xff]
        %v271 = vld [vmem:[%s210 + $0x10] sm:$0xff]
        %v272 = vld [vmem:[%s210 + $0x18] sm:$0xff]
        %v273 = vld [vmem:[%s210 + $0x20] sm:$0xff]
        %v274 = vld [vmem:[%s210 + $0x28] sm:$0xff]
        %v275 = vld [vmem:[%s210 + $0x30] sm:$0xff]
        %v276 = vld [vmem:[%s210 + $0x38] sm:$0xff]
        %v277 = vld [vmem:[%s210 + $0x40] sm:$0xff]
        %v278 = vld [vmem:[%s210 + $0x48] sm:$0xff]
        %v279 = vld [vmem:[%s210 + $0x50] sm:$0xff]
        %v280 = vld [vmem:[%s210 + $0x58] sm:$0xff]
        %v281 = vld [vmem:[%s210 + $0x60] sm:$0xff]
        %v282 = vld [vmem:[%s210 + $0x68] sm:$0xff]
        %v283 = vld [vmem:[%s210 + $0x70] sm:$0xff]
        %v284 = vld [vmem:[%s210 + $0x78] sm:$0xff]
        %v285 = vld [vmem:[%s210 + $0x80] sm:$0xff]
        %v286 = vld [vmem:[%s210 + $0x88] sm:$0xff]
        %v287 = vld [vmem:[%s210 + $0x90] sm:$0xff]
        %v288 = vld [vmem:[%s210 + $0x98] sm:$0xff]
        %v289 = vld [vmem:[%s210 + $0xa0] sm:$0xff]
        %v290 = vld [vmem:[%s210 + $0xa8] sm:$0xff]
        %v291 = vld [vmem:[%s210 + $0xb0] sm:$0xff]
        %v292 = vld [vmem:[%s210 + $0xb8] sm:$0xff]
        %v293 = vld [vmem:[%s210 + $0xc0] sm:$0xff]
        %v294 = vld [vmem:[%s210 + $0xc8] sm:$0xff]
        %v295 = vld [vmem:[%s210 + $0xd0] sm:$0xff]
        %v296 = vld [vmem:[%s210 + $0xd8] sm:$0xff]
        %v297 = vld [vmem:[%s210 + $0xe0] sm:$0xff]
        %v298 = vld [vmem:[%s210 + $0xe8] sm:$0xff]
        %v299 = vld [vmem:[%s210 + $0xf0] sm:$0xff]
        %v300 = vld [vmem:[%s210 + $0xf8] sm:$0xff]
        %v301 = vld [vmem:[%s219] sm:$0xff]
        %v302 = vld [vmem:[%s219 + $0x8] sm:$0xff]
        %v303 = vld [vmem:[%s219 + $0x10] sm:$0xff]
        %v304 = vld [vmem:[%s219 + $0x18] sm:$0xff]
        %v305 = vld [vmem:[%s219 + $0x20] sm:$0xff]
        %v306 = vld [vmem:[%s219 + $0x28] sm:$0xff]
        %v307 = vld [vmem:[%s219 + $0x30] sm:$0xff]
        %v308 = vld [vmem:[%s219 + $0x38] sm:$0xff]
        %v309 = vld [vmem:[%s219 + $0x40] sm:$0xff]
        %v310 = vld [vmem:[%s219 + $0x48] sm:$0xff]
        %v311 = vld [vmem:[%s219 + $0x50] sm:$0xff]
        %v312 = vld [vmem:[%s219 + $0x58] sm:$0xff]
        %v313 = vld [vmem:[%s219 + $0x60] sm:$0xff]
        %v314 = vld [vmem:[%s219 + $0x68] sm:$0xff]
        %v315 = vld [vmem:[%s219 + $0x70] sm:$0xff]
        %v316 = vld [vmem:[%s219 + $0x78] sm:$0xff]
        %v317 = vld [vmem:[%s219 + $0x80] sm:$0xff]
        %v318 = vld [vmem:[%s219 + $0x88] sm:$0xff]
        %v319 = vld [vmem:[%s219 + $0x90] sm:$0xff]
        %v320 = vld [vmem:[%s219 + $0x98] sm:$0xff]
        %v321 = vld [vmem:[%s219 + $0xa0] sm:$0xff]
        %v322 = vld [vmem:[%s219 + $0xa8] sm:$0xff]
        %v323 = vld [vmem:[%s219 + $0xb0] sm:$0xff]
        %v324 = vld [vmem:[%s219 + $0xb8] sm:$0xff]
        %v325 = vld [vmem:[%s219 + $0xc0] sm:$0xff]
        %v326 = vld [vmem:[%s219 + $0xc8] sm:$0xff]
        %v327 = vld [vmem:[%s219 + $0xd0] sm:$0xff]
        %v328 = vld [vmem:[%s219 + $0xd8] sm:$0xff]
        %v329 = vld [vmem:[%s219 + $0xe0] sm:$0xff]
        %v330 = vld [vmem:[%s219 + $0xe8] sm:$0xff]
        %v331 = vld [vmem:[%s219 + $0xf0] sm:$0xff]
        %v332 = vld [vmem:[%s219 + $0xf8] sm:$0xff]
        %vm333 = vcmp.ne.f32.partialorder %v301, 0.0
        %vm334 = vcmp.ne.f32.partialorder %v302, 0.0
        %vm335 = vcmp.ne.f32.partialorder %v303, 0.0
        %vm336 = vcmp.ne.f32.partialorder %v304, 0.0
        %vm337 = vcmp.ne.f32.partialorder %v305, 0.0
        %vm338 = vcmp.ne.f32.partialorder %v306, 0.0
        %vm339 = vcmp.ne.f32.partialorder %v307, 0.0
        %vm340 = vcmp.ne.f32.partialorder %v308, 0.0
        %vm341 = vcmp.ne.f32.partialorder %v309, 0.0
        %vm342 = vcmp.ne.f32.partialorder %v310, 0.0
        %vm343 = vcmp.ne.f32.partialorder %v311, 0.0
        %vm344 = vcmp.ne.f32.partialorder %v312, 0.0
        %vm345 = vcmp.ne.f32.partialorder %v313, 0.0
        %vm346 = vcmp.ne.f32.partialorder %v314, 0.0
        %vm347 = vcmp.ne.f32.partialorder %v315, 0.0
        %vm348 = vcmp.ne.f32.partialorder %v316, 0.0
        %vm349 = vcmp.ne.f32.partialorder %v317, 0.0
        %vm350 = vcmp.ne.f32.partialorder %v318, 0.0
        %vm351 = vcmp.ne.f32.partialorder %v319, 0.0
        %vm352 = vcmp.ne.f32.partialorder %v320, 0.0
        %vm353 = vcmp.ne.f32.partialorder %v321, 0.0
        %vm354 = vcmp.ne.f32.partialorder %v322, 0.0
        %vm355 = vcmp.ne.f32.partialorder %v323, 0.0
        %vm356 = vcmp.ne.f32.partialorder %v324, 0.0
        %vm357 = vcmp.ne.f32.partialorder %v325, 0.0
        %vm358 = vcmp.ne.f32.partialorder %v326, 0.0
        %vm359 = vcmp.ne.f32.partialorder %v327, 0.0
        %vm360 = vcmp.ne.f32.partialorder %v328, 0.0
        %vm361 = vcmp.ne.f32.partialorder %v329, 0.0
        %vm362 = vcmp.ne.f32.partialorder %v330, 0.0
        %vm363 = vcmp.ne.f32.partialorder %v331, 0.0
        %vm364 = vcmp.ne.f32.partialorder %v332, 0.0
        %v365 = vsel %vm333, 1, 0
        %v366 = vsel %vm334, 1, 0
        %v367 = vsel %vm335, 1, 0
        %v368 = vsel %vm336, 1, 0
        %v369 = vsel %vm337, 1, 0
        %v370 = vsel %vm338, 1, 0
        %v371 = vsel %vm339, 1, 0
        %v372 = vsel %vm340, 1, 0
        %v373 = vsel %vm341, 1, 0
        %v374 = vsel %vm342, 1, 0
        %v375 = vsel %vm343, 1, 0
        %v376 = vsel %vm344, 1, 0
        %v377 = vsel %vm345, 1, 0
        %v378 = vsel %vm346, 1, 0
        %v379 = vsel %vm347, 1, 0
        %v380 = vsel %vm348, 1, 0
        %v381 = vsel %vm349, 1, 0
        %v382 = vsel %vm350, 1, 0
        %v383 = vsel %vm351, 1, 0
        %v384 = vsel %vm352, 1, 0
        %v385 = vsel %vm353, 1, 0
        %v386 = vsel %vm354, 1, 0
        %v387 = vsel %vm355, 1, 0
        %v388 = vsel %vm356, 1, 0
        %v389 = vsel %vm357, 1, 0
        %v390 = vsel %vm358, 1, 0
        %v391 = vsel %vm359, 1, 0
        %v392 = vsel %vm360, 1, 0
        %v393 = vsel %vm361, 1, 0
        %v394 = vsel %vm362, 1, 0
        %v395 = vsel %vm363, 1, 0
        %v396 = vsel %vm364, 1, 0
        %v397 = vcvt.s32.f32 %v365
        %v398 = vcvt.s32.f32 %v366
        %v399 = vcvt.s32.f32 %v367
        %v400 = vcvt.s32.f32 %v368
        %v401 = vcvt.s32.f32 %v369
        %v402 = vcvt.s32.f32 %v370
        %v403 = vcvt.s32.f32 %v371
        %v404 = vcvt.s32.f32 %v372
        %v405 = vcvt.s32.f32 %v373
        %v406 = vcvt.s32.f32 %v374
        %v407 = vcvt.s32.f32 %v375
        %v408 = vcvt.s32.f32 %v376
        %v409 = vcvt.s32.f32 %v377
        %v410 = vcvt.s32.f32 %v378
        %v411 = vcvt.s32.f32 %v379
        %v412 = vcvt.s32.f32 %v380
        %v413 = vcvt.s32.f32 %v381
        %v414 = vcvt.s32.f32 %v382
        %v415 = vcvt.s32.f32 %v383
        %v416 = vcvt.s32.f32 %v384
        %v417 = vcvt.s32.f32 %v385
        %v418 = vcvt.s32.f32 %v386
        %v419 = vcvt.s32.f32 %v387
        %v420 = vcvt.s32.f32 %v388
        %v421 = vcvt.s32.f32 %v389
        %v422 = vcvt.s32.f32 %v390
        %v423 = vcvt.s32.f32 %v391
        %v424 = vcvt.s32.f32 %v392
        %v425 = vcvt.s32.f32 %v393
        %v426 = vcvt.s32.f32 %v394
        %v427 = vcvt.s32.f32 %v395
        %v428 = vcvt.s32.f32 %v396
        %v429 = vmul.f32 %v269, %v397
        %v430 = vmul.f32 %v270, %v398
        %v431 = vmul.f32 %v271, %v399
        %v432 = vmul.f32 %v272, %v400
        %v433 = vmul.f32 %v273, %v401
        %v434 = vmul.f32 %v274, %v402
        %v435 = vmul.f32 %v275, %v403
        %v436 = vmul.f32 %v276, %v404
        %v437 = vmul.f32 %v277, %v405
        %v438 = vmul.f32 %v278, %v406
        %v439 = vmul.f32 %v279, %v407
        %v440 = vmul.f32 %v280, %v408
        %v441 = vmul.f32 %v281, %v409
        %v442 = vmul.f32 %v282, %v410
        %v443 = vmul.f32 %v283, %v411
        %v444 = vmul.f32 %v284, %v412
        %v445 = vmul.f32 %v285, %v413
        %v446 = vmul.f32 %v286, %v414
        %v447 = vmul.f32 %v287, %v415
        %v448 = vmul.f32 %v288, %v416
        %v449 = vmul.f32 %v289, %v417
        %v450 = vmul.f32 %v290, %v418
        %v451 = vmul.f32 %v291, %v419
        %v452 = vmul.f32 %v292, %v420
        %v453 = vmul.f32 %v293, %v421
        %v454 = vmul.f32 %v294, %v422
        %v455 = vmul.f32 %v295, %v423
        %v456 = vmul.f32 %v296, %v424
        %v457 = vmul.f32 %v297, %v425
        %v458 = vmul.f32 %v298, %v426
        %v459 = vmul.f32 %v299, %v427
        %v460 = vmul.f32 %v300, %v428
        %v461 = vsub.f32 %v429, %v301
        %v462 = vsub.f32 %v430, %v302
        %v463 = vsub.f32 %v431, %v303
        %v464 = vsub.f32 %v432, %v304
        %v465 = vsub.f32 %v433, %v305
        %v466 = vsub.f32 %v434, %v306
        %v467 = vsub.f32 %v435, %v307
        %v468 = vsub.f32 %v436, %v308
        %v469 = vsub.f32 %v437, %v309
        %v470 = vsub.f32 %v438, %v310
        %v471 = vsub.f32 %v439, %v311
        %v472 = vsub.f32 %v440, %v312
        %v473 = vsub.f32 %v441, %v313
        %v474 = vsub.f32 %v442, %v314
        %v475 = vsub.f32 %v443, %v315
        %v476 = vsub.f32 %v444, %v316
        %v477 = vsub.f32 %v445, %v317
        %v478 = vsub.f32 %v446, %v318
        %v479 = vsub.f32 %v447, %v319
        %v480 = vsub.f32 %v448, %v320
        %v481 = vsub.f32 %v449, %v321
        %v482 = vsub.f32 %v450, %v322
        %v483 = vsub.f32 %v451, %v323
        %v484 = vsub.f32 %v452, %v324
        %v485 = vsub.f32 %v453, %v325
        %v486 = vsub.f32 %v454, %v326
        %v487 = vsub.f32 %v455, %v327
        %v488 = vsub.f32 %v456, %v328
        %v489 = vsub.f32 %v457, %v329
        %v490 = vsub.f32 %v458, %v330
        %v491 = vsub.f32 %v459, %v331
        %v492 = vsub.f32 %v460, %v332
        %v493 = vmul.f32 %v461, %v461
        %v494 = vmul.f32 %v462, %v462
        %v495 = vmul.f32 %v463, %v463
        %v496 = vmul.f32 %v464, %v464
        %v497 = vmul.f32 %v465, %v465
        %v498 = vmul.f32 %v466, %v466
        %v499 = vmul.f32 %v467, %v467
        %v500 = vmul.f32 %v468, %v468
        %v501 = vmul.f32 %v469, %v469
        %v502 = vmul.f32 %v470, %v470
        %v503 = vmul.f32 %v471, %v471
        %v504 = vmul.f32 %v472, %v472
        %v505 = vmul.f32 %v473, %v473
        %v506 = vmul.f32 %v474, %v474
        %v507 = vmul.f32 %v475, %v475
        %v508 = vmul.f32 %v476, %v476
        %v509 = vmul.f32 %v477, %v477
        %v510 = vmul.f32 %v478, %v478
        %v511 = vmul.f32 %v479, %v479
        %v512 = vmul.f32 %v480, %v480
        %v513 = vmul.f32 %v481, %v481
        %v514 = vmul.f32 %v482, %v482
        %v515 = vmul.f32 %v483, %v483
        %v516 = vmul.f32 %v484, %v484
        %v517 = vmul.f32 %v485, %v485
        %v518 = vmul.f32 %v486, %v486
        %v519 = vmul.f32 %v487, %v487
        %v520 = vmul.f32 %v488, %v488
        %v521 = vmul.f32 %v489, %v489
        %v522 = vmul.f32 %v490, %v490
        %v523 = vmul.f32 %v491, %v491
        %v524 = vmul.f32 %v492, %v492
        %vm525 = vmpackc.low %vm334, %vm333
        %vm526 = vmpackc.low %vm336, %vm335
        %vm527 = vmpackc.even %vm526, %vm525
        %vm528 = vmpackc.low %vm338, %vm337
        %vm529 = vmpackc.low %vm340, %vm339
        %vm530 = vmpackc.even %vm529, %vm528
        %vm531 = vmpackc.low %vm342, %vm341
        %vm532 = vmpackc.low %vm344, %vm343
        %vm533 = vmpackc.even %vm532, %vm531
        %vm534 = vmpackc.low %vm346, %vm345
        %vm535 = vmpackc.low %vm348, %vm347
        %vm536 = vmpackc.even %vm535, %vm534
        %vm537 = vmpackc.low %vm350, %vm349
        %vm538 = vmpackc.low %vm352, %vm351
        %vm539 = vmpackc.even %vm538, %vm537
        %vm540 = vmpackc.low %vm354, %vm353
        %vm541 = vmpackc.low %vm356, %vm355
        %vm542 = vmpackc.even %vm541, %vm540
        %vm543 = vmpackc.low %vm358, %vm357
        %vm544 = vmpackc.low %vm360, %vm359
        %vm545 = vmpackc.even %vm544, %vm543
        %vm546 = vmpackc.low %vm362, %vm361
        %vm547 = vmpackc.low %vm364, %vm363
        %vm548 = vmpackc.even %vm547, %vm546
        %v549 = vsel %vm527, 16843009, 0
        %v550 = vsel %vm530, 16843009, 0
        %v551 = vsel %vm533, 16843009, 0
        %v552 = vsel %vm536, 16843009, 0
        %v553 = vsel %vm539, 16843009, 0
        %v554 = vsel %vm542, 16843009, 0
        %v555 = vsel %vm545, 16843009, 0
        %v556 = vsel %vm548, 16843009, 0
        %557 = vst [vmem:[%s251] sm:$0xff] %v549
        %558 = vst [vmem:[%s251 + $0x8] sm:$0xff] %v550
        %559 = vst [vmem:[%s251 + $0x10] sm:$0xff] %v551
        %560 = vst [vmem:[%s251 + $0x18] sm:$0xff] %v552
        %561 = vst [vmem:[%s251 + $0x20] sm:$0xff] %v553
        %562 = vst [vmem:[%s251 + $0x28] sm:$0xff] %v554
        %563 = vst [vmem:[%s251 + $0x30] sm:$0xff] %v555
        %564 = vst [vmem:[%s251 + $0x38] sm:$0xff] %v556
        %p565 = scmp.eq.s32.totalorder %s27, 2
        %p566 = scmp.ne.s32.totalorder %s27, 2
        // Predicated region
        $region37: #{tpu_custom_call.1} parent=27 // pred_check
          %p567 = pneg %p566
        $region38: #{tpu_custom_call.1} parent=27 // pred_check_branch
          %569 = sbr.rel (%p567) target = $region40
        $region39: #{tpu_custom_call.1} parent=27 // pred_region
          %v570 = vadd.f32 %v493, %v494
          %v571 = vadd.f32 %v570, %v495
          %v572 = vadd.f32 %v571, %v496
          %v573 = vadd.f32 %v572, %v497
          %v574 = vadd.f32 %v573, %v498
          %v575 = vadd.f32 %v574, %v499
          %v576 = vadd.f32 %v575, %v500
          %v577 = vadd.f32 %v576, %v501
          %v578 = vadd.f32 %v577, %v502
          %v579 = vadd.f32 %v578, %v503
          %v580 = vadd.f32 %v579, %v504
          %v581 = vadd.f32 %v580, %v505
          %v582 = vadd.f32 %v581, %v506
          %v583 = vadd.f32 %v582, %v507
          %v584 = vadd.f32 %v583, %v508
          %v585 = vadd.f32 %v584, %v509
          %v586 = vadd.f32 %v585, %v510
          %v587 = vadd.f32 %v586, %v511
          %v588 = vadd.f32 %v587, %v512
          %v589 = vadd.f32 %v588, %v513
          %v590 = vadd.f32 %v589, %v514
          %v591 = vadd.f32 %v590, %v515
          %v592 = vadd.f32 %v591, %v516
          %v593 = vadd.f32 %v592, %v517
          %v594 = vadd.f32 %v593, %v518
          %v595 = vadd.f32 %v594, %v519
          %v596 = vadd.f32 %v595, %v520
          %v597 = vadd.f32 %v596, %v521
          %v598 = vadd.f32 %v597, %v522
          %v599 = vadd.f32 %v598, %v523
          %v600 = vadd.f32 %v599, %v524
          %v601 = vadd.f32 %v600, 0.0
          %602 = vst [vmem:[%s244] sm:$0xff] %v601
        $region40: #{tpu_custom_call.1} parent=27 // pred_fallthru
          _
        // Predicated region
        $region41: #{tpu_custom_call.1} parent=27 // pred_check
          %p603 = pneg %p565
        $region42: #{tpu_custom_call.1} parent=27 // pred_check_branch
          %605 = sbr.rel (%p603) target = $region44
        $region43: #{tpu_custom_call.1} parent=27 // pred_region
          %s606 = smul.u32 %s27, 256
          %s607 = ssub.s32 608, %s606
          %v608 = vlaneseq
          %v609 = vshrl.u32 %v608, 7
          %v610 = vadd.s32 %v609, 8
          %v611 = vadd.s32 %v609, 16
          %v612 = vadd.s32 %v609, 24
          %v613 = vadd.s32 %v609, 32
          %v614 = vadd.s32 %v609, 40
          %v615 = vadd.s32 %v609, 48
          %v616 = vadd.s32 %v609, 56
          %v617 = vadd.s32 %v609, 64
          %v618 = vadd.s32 %v609, 72
          %v619 = vadd.s32 %v609, 80
          %v620 = vadd.s32 %v609, 88
          %v621 = vadd.s32 %v609, 96
          %v622 = vadd.s32 %v609, 104
          %v623 = vadd.s32 %v609, 112
          %v624 = vadd.s32 %v609, 120
          %v625 = vadd.s32 %v609, 128
          %v626 = vadd.s32 %v609, 136
          %v627 = vadd.s32 %v609, 144
          %v628 = vadd.s32 %v609, 152
          %v629 = vadd.s32 %v609, 160
          %v630 = vadd.s32 %v609, 168
          %v631 = vadd.s32 %v609, 176
          %v632 = vadd.s32 %v609, 184
          %v633 = vadd.s32 %v609, 192
          %v634 = vadd.s32 %v609, 200
          %v635 = vadd.s32 %v609, 208
          %v636 = vadd.s32 %v609, 216
          %v637 = vadd.s32 %v609, 224
          %v638 = vadd.s32 %v609, 232
          %v639 = vadd.s32 %v609, 240
          %v640 = vadd.s32 %v609, 248
          %v641 = vstv %s607
          %vm642 = vcmp.lt.s32.totalorder %v609, %v641
          %vm643 = vcmp.lt.s32.totalorder %v610, %v641
          %vm644 = vcmp.lt.s32.totalorder %v611, %v641
          %vm645 = vcmp.lt.s32.totalorder %v612, %v641
          %vm646 = vcmp.lt.s32.totalorder %v613, %v641
          %vm647 = vcmp.lt.s32.totalorder %v614, %v641
          %vm648 = vcmp.lt.s32.totalorder %v615, %v641
          %vm649 = vcmp.lt.s32.totalorder %v616, %v641
          %vm650 = vcmp.lt.s32.totalorder %v617, %v641
          %vm651 = vcmp.lt.s32.totalorder %v618, %v641
          %vm652 = vcmp.lt.s32.totalorder %v619, %v641
          %vm653 = vcmp.lt.s32.totalorder %v620, %v641
          %vm654 = vcmp.lt.s32.totalorder %v621, %v641
          %vm655 = vcmp.lt.s32.totalorder %v622, %v641
          %vm656 = vcmp.lt.s32.totalorder %v623, %v641
          %vm657 = vcmp.lt.s32.totalorder %v624, %v641
          %vm658 = vcmp.lt.s32.totalorder %v625, %v641
          %vm659 = vcmp.lt.s32.totalorder %v626, %v641
          %vm660 = vcmp.lt.s32.totalorder %v627, %v641
          %vm661 = vcmp.lt.s32.totalorder %v628, %v641
          %vm662 = vcmp.lt.s32.totalorder %v629, %v641
          %vm663 = vcmp.lt.s32.totalorder %v630, %v641
          %vm664 = vcmp.lt.s32.totalorder %v631, %v641
          %vm665 = vcmp.lt.s32.totalorder %v632, %v641
          %vm666 = vcmp.lt.s32.totalorder %v633, %v641
          %vm667 = vcmp.lt.s32.totalorder %v634, %v641
          %vm668 = vcmp.lt.s32.totalorder %v635, %v641
          %vm669 = vcmp.lt.s32.totalorder %v636, %v641
          %vm670 = vcmp.lt.s32.totalorder %v637, %v641
          %vm671 = vcmp.lt.s32.totalorder %v638, %v641
          %vm672 = vcmp.lt.s32.totalorder %v639, %v641
          %vm673 = vcmp.lt.s32.totalorder %v640, %v641
          %v674 = vsel %vm642, %v493, 0.0
          %v675 = vsel %vm643, %v494, 0.0
          %v676 = vsel %vm644, %v495, 0.0
          %v677 = vsel %vm645, %v496, 0.0
          %v678 = vsel %vm646, %v497, 0.0
          %v679 = vsel %vm647, %v498, 0.0
          %v680 = vsel %vm648, %v499, 0.0
          %v681 = vsel %vm649, %v500, 0.0
          %v682 = vsel %vm650, %v501, 0.0
          %v683 = vsel %vm651, %v502, 0.0
          %v684 = vsel %vm652, %v503, 0.0
          %v685 = vsel %vm653, %v504, 0.0
          %v686 = vsel %vm654, %v505, 0.0
          %v687 = vsel %vm655, %v506, 0.0
          %v688 = vsel %vm656, %v507, 0.0
          %v689 = vsel %vm657, %v508, 0.0
          %v690 = vsel %vm658, %v509, 0.0
          %v691 = vsel %vm659, %v510, 0.0
          %v692 = vsel %vm660, %v511, 0.0
          %v693 = vsel %vm661, %v512, 0.0
          %v694 = vsel %vm662, %v513, 0.0
          %v695 = vsel %vm663, %v514, 0.0
          %v696 = vsel %vm664, %v515, 0.0
          %v697 = vsel %vm665, %v516, 0.0
          %v698 = vsel %vm666, %v517, 0.0
          %v699 = vsel %vm667, %v518, 0.0
          %v700 = vsel %vm668, %v519, 0.0
          %v701 = vsel %vm669, %v520, 0.0
          %v702 = vsel %vm670, %v521, 0.0
          %v703 = vsel %vm671, %v522, 0.0
          %v704 = vsel %vm672, %v523, 0.0
          %v705 = vsel %vm673, %v524, 0.0
          %v706 = vadd.f32 %v674, %v675
          %v707 = vadd.f32 %v706, %v676
          %v708 = vadd.f32 %v707, %v677
          %v709 = vadd.f32 %v708, %v678
          %v710 = vadd.f32 %v709, %v679
          %v711 = vadd.f32 %v710, %v680
          %v712 = vadd.f32 %v711, %v681
          %v713 = vadd.f32 %v712, %v682
          %v714 = vadd.f32 %v713, %v683
          %v715 = vadd.f32 %v714, %v684
          %v716 = vadd.f32 %v715, %v685
          %v717 = vadd.f32 %v716, %v686
          %v718 = vadd.f32 %v717, %v687
          %v719 = vadd.f32 %v718, %v688
          %v720 = vadd.f32 %v719, %v689
          %v721 = vadd.f32 %v720, %v690
          %v722 = vadd.f32 %v721, %v691
          %v723 = vadd.f32 %v722, %v692
          %v724 = vadd.f32 %v723, %v693
          %v725 = vadd.f32 %v724, %v694
          %v726 = vadd.f32 %v725, %v695
          %v727 = vadd.f32 %v726, %v696
          %v728 = vadd.f32 %v727, %v697
          %v729 = vadd.f32 %v728, %v698
          %v730 = vadd.f32 %v729, %v699
          %v731 = vadd.f32 %v730, %v700
          %v732 = vadd.f32 %v731, %v701
          %v733 = vadd.f32 %v732, %v702
          %v734 = vadd.f32 %v733, %v703
          %v735 = vadd.f32 %v734, %v704
          %v736 = vadd.f32 %v735, %v705
          %v737 = vadd.f32 %v736, 0.0
          %738 = vst [vmem:[%s244] sm:$0xff] %v737
        $region44: #{tpu_custom_call.1} parent=27 // pred_fallthru
          _
        %s739 = sand.u32 %s87, 1
        %s740 = scalar_lea.sflag [#allocation4], %s739
        %s741 = sand.u32 %s87, 1
        %s742 = smul.addr %s741, 8
        %s743 = scalar_lea.vmem [#allocation7], %s742
        %s744 = sand.u32 %s113, 1
        %s745 = scalar_lea.sflag [#allocation9], %s744
        %s746 = sand.u32 %s113, 1
        %s747 = smul.addr %s746, 64
        %s748 = scalar_lea.vmem [#allocation8], %s747
        // Predicated region
        $region45: #{tpu_custom_call.1} parent=27 // pred_check
          %p749 = pneg %p97
        $region46: #{tpu_custom_call.1} parent=27 // pred_check_branch
          %751 = sbr.rel (%p749) target = $region48
        $region47: #{tpu_custom_call.1} parent=27 // pred_region
          %s753 = ssub.s32 128, 128
          %754 = vsyncadd %s740, %s753
          %s755 = smul.addr %s27, 128
          %s756 = scalar_lea.hbm %s2, %s755
          %s758 = sshll.u32 %s743, 4
          %s759 = int_to_ptr.vmem [resolvable:$true] %s758
          %761 = dma.vmem_to_hbm [thread:$0]  %s759, 128, %s756, %s740
        $region48: #{tpu_custom_call.1} parent=27 // pred_fallthru
          _
        // Predicated region
        $region49: #{tpu_custom_call.1} parent=27 // pred_check
          %p762 = pneg %p123
        $region50: #{tpu_custom_call.1} parent=27 // pred_check_branch
          %764 = sbr.rel (%p762) target = $region52
        $region51: #{tpu_custom_call.1} parent=27 // pred_region
          %s765 = smul.u32 8, %s27
          %s766 = ssub.s32 19, %s765
          %p767 = scmp.lt.s32.totalorder %s766, 8
          %s768 = scalar_select %p767, %s766, 8
          %s769 = smul.u32 128, %s768
          %s771 = ssub.s32 1024, %s769
          %772 = vsyncadd %s745, %s771
          %p773 = scmp.ne.s32.totalorder 0, %s769
          %s774 = smul.addr %s765, 128
          %s775 = scalar_lea.hbm %s3, %s774
          %s776 = smul.u32 8, %s768
          %s777 = sshll.u32 %s748, 4
          %s778 = int_to_ptr.vmem [resolvable:$true] %s777
          %s779 = sshll.u32 %s776, 4
          %783 = dma.vmem_to_hbm [thread:$0]  (%p773), %s778, %s779, %s775, %s745, 128, 128, 8
        $region52: #{tpu_custom_call.1} parent=27 // pred_fallthru
          _
      $region28: #{tpu_custom_call.1} parent=5 // pred_fallthru
        _
      %p784 = scmp.le.s32.totalorder 2, %s22
      // Predicated region
      $region53: #{tpu_custom_call.1} parent=5 // pred_check
        %p785 = pneg %p784
      $region54: #{tpu_custom_call.1} parent=5 // pred_check_branch
        %787 = sbr.rel (%p785) target = $region56
      $region55: #{tpu_custom_call.1} parent=5 // pred_region
        %s788 = ssub.s32 %s22, 2
        // Predicated region
        $region57: #{tpu_custom_call.1} parent=55 // pred_check
          %p789 = pneg %p103
        $region58: #{tpu_custom_call.1} parent=55 // pred_check_branch
          %791 = sbr.rel (%p789) target = $region60
        $region59: #{tpu_custom_call.1} parent=55 // pred_region
          %s792 = sand.u32 %s88, 1
          %s793 = scalar_lea.sflag [#allocation4], %s792
          %s794 = sand.u32 %s88, 1
          %s795 = smul.addr %s794, 8
          %s796 = scalar_lea.vmem [#allocation7], %s795
          %797 = dma.done %s793, 128
        $region60: #{tpu_custom_call.1} parent=55 // pred_fallthru
          _
        // Predicated region
        $region61: #{tpu_custom_call.1} parent=55 // pred_check
          %p798 = pneg %p129
        $region62: #{tpu_custom_call.1} parent=55 // pred_check_branch
          %800 = sbr.rel (%p798) target = $region64
        $region63: #{tpu_custom_call.1} parent=55 // pred_region
          %s801 = sand.u32 %s114, 1
          %s802 = scalar_lea.sflag [#allocation9], %s801
          %s803 = sand.u32 %s114, 1
          %s804 = smul.addr %s803, 64
          %s805 = scalar_lea.vmem [#allocation8], %s804
          %806 = dma.done %s802, 1024
        $region64: #{tpu_custom_call.1} parent=55 // pred_fallthru
          _
      $region56: #{tpu_custom_call.1} parent=5 // pred_fallthru
        _
    $region6: #{tpu_custom_call.1} parent=1 // loop_footer
      %s26 = sadd.s32 1, %s22
    $region7: #{tpu_custom_call.1} parent=1 // loop_footer_branch
      %21 = sbr.rel target = $region3
    $region8: #{tpu_custom_call.1} parent=1 // loop_exit
      _
    %807 = vsyncpa [#allocation3], 1
    %s808 = scalar_lea.sflag [#allocation3], 1
    %809 = vsyncpa %s808, 1
    %810 = vsyncpa [#allocation6], 1
    %s811 = scalar_lea.sflag [#allocation6], 1
    %812 = vsyncpa %s811, 1
    %813 = vsyncpa [#allocation4], 1
    %s814 = scalar_lea.sflag [#allocation4], 1
    %815 = vsyncpa %s814, 1
    %816 = vsyncpa [#allocation9], 1
    %s817 = scalar_lea.sflag [#allocation9], 1
    %818 = vsyncpa %s817, 1

</llo_original>
